<compile_context>
chip_gen: v5e
topology: v5e:2x2
jax: 0.10.0
libtpu: 0.0.40
codegen_flags: <defaults>
</compile_context>

<pallas_src>
import functools

import jax
import jax.numpy as jnp
from jax import lax
from jax.experimental import pallas as pl
from jax.experimental.pallas import tpu as pltpu

VALID_THETA = {
    "t-shirt": [0, 1, 2, 3, 6, 9, 12, 13, 14, 16, 17, 18, 19],
    "old-t-shirt": [0, 1, 2, 3, 6, 9, 12, 13, 14, 16, 17, 18, 19],
    "shirt": [0, 1, 2, 3, 6, 9, 12, 13, 14, 16, 17, 18, 19, 20, 21],
    "pant": [0, 1, 2, 4, 5, 7, 8],
    "skirt": [0, 1, 2],
}


# ---------------------------------------------------------------------------
# small helpers
# ---------------------------------------------------------------------------
def _round_up(n, m):
    return ((n + m - 1) // m) * m


def _pad_axis(x, axis, target):
    pad = target - x.shape[axis]
    if pad <= 0:
        return x
    widths = [(0, 0)] * x.ndim
    widths[axis] = (0, pad)
    return jnp.pad(x, widths)


# ---------------------------------------------------------------------------
# Input masking (glue, matches mask_thetas / mask_betas / mask_gammas)
# ---------------------------------------------------------------------------
def mask_thetas(thetas, cloth_type):
    valid = jnp.array(VALID_THETA[cloth_type], dtype=jnp.int32)
    mask = jnp.zeros((24, 3), jnp.float32).at[valid].set(1.0).reshape(72)
    return thetas * mask[None, :]


def mask_betas(betas):
    mask = jnp.zeros((10,), jnp.float32).at[jnp.array([0, 1])].set(1.0)
    return betas * mask[None, :]


def mask_gammas(gammas, cloth_type):
    mask = jnp.zeros((4,), jnp.float32).at[jnp.array([0, 1])].set(1.0)
    g = gammas * mask[None, :]
    if cloth_type == "old-t-shirt":
        g = g + jnp.array([[0.0, 0.0, 1.5, 0.0]], jnp.float32)
    return g


# ---------------------------------------------------------------------------
# Kernel 1: stacked layers 1-2 (Linear/ReLU/[Dropout=id]/Linear/ReLU) for all nets.
# Tiny (weights are F*H + H*H per net); output h is [K_all, B_pad, H] bf16.
# ---------------------------------------------------------------------------
def _mlp12_kernel(x_ref, w1_ref, b1_ref, w2_ref, b2_ref, h_ref):
    x = x_ref[...].astype(jnp.bfloat16)
    h = jnp.dot(x, w1_ref[...], preferred_element_type=jnp.float32) + b1_ref[...]
    h = jnp.maximum(h, 0.0)
    # nn.Dropout(p=0.2) is the identity in eval mode.
    h = jnp.dot(h.astype(jnp.bfloat16), w2_ref[...],
                preferred_element_type=jnp.float32) + b2_ref[...]
    h = jnp.maximum(h, 0.0)
    h_ref[...] = h.astype(h_ref.dtype)


def mlp12_stack(x, w1, b1, w2, b2):
    """x: [K, B_pad, F_pad] f32; w1: [K, F_pad, H] bf16; w2: [K, H, H] bf16 -> [K, B_pad, H] bf16."""
    K, B_pad, F = x.shape
    H = w1.shape[2]
    return pl.pallas_call(
        _mlp12_kernel,
        out_shape=jax.ShapeDtypeStruct((K, B_pad, H), jnp.bfloat16),
        grid=(K,),
        in_specs=[
            pl.BlockSpec((None, B_pad, F), lambda k: (k, 0, 0)),
            pl.BlockSpec((None, F, H), lambda k: (k, 0, 0)),
            pl.BlockSpec((None, 1, H), lambda k: (k, 0, 0)),
            pl.BlockSpec((None, H, H), lambda k: (k, 0, 0)),
            pl.BlockSpec((None, 1, H), lambda k: (k, 0, 0)),
        ],
        out_specs=pl.BlockSpec((None, B_pad, H), lambda k: (k, 0, 0)),
        # each network is independent -> parallel axis (sharded across v7x's 2 TCs)
        compiler_params=pltpu.CompilerParams(dimension_semantics=("parallel",)),
    )(x, w1, b1, w2, b2)


# ---------------------------------------------------------------------------
# Kernel 2: SS2G layer-3 (D-tiled) + RBF pivot weights.
# dist[k,b] accumulates  ||basis_k||^2 - 2*basis_k . rest_b  over D tiles (MXU);
# the ||rest_b||^2 term is constant over pivots and cancels in the normalized
# exp(-dist/sigma) weights, so it is dropped (mathematically identical weights).
# ---------------------------------------------------------------------------
def _rbf_weights_kernel(h_ref, w3_ref, b3_ref, basis_ref, w_ref, dist_ref, *,
                        scale_over_sigma):
    j = pl.program_id(0)

    @pl.when(j == 0)
    def _():
        dist_ref[...] = jnp.zeros_like(dist_ref)

    # rest tile from the SS2G network: [B_pad, TN] fp32
    rest = jnp.dot(h_ref[...], w3_ref[...],
                   preferred_element_type=jnp.float32) + b3_ref[...]
    basis = basis_ref[...]                                            # [K_piv, TN]
    # cross[k,b] = sum_t basis[k,t]*rest[b,t]  (MXU, no [K,B,D] broadcast temp)
    cross = lax.dot_general(basis, rest, (((1,), (1,)), ((), ())),
                            preferred_element_type=jnp.float32)       # [K_piv, B_pad]
    dist_ref[...] += jnp.sum(basis * basis, axis=1, keepdims=True) - 2.0 * cross

    @pl.when(j == pl.num_programs(0) - 1)
    def _():
        # exp(-dist * 1000/n_verts / sigma), normalized over pivots (max-subtracted
        # for fp stability; identical to the reference in exact arithmetic).
        neg = -dist_ref[...] * scale_over_sigma
        neg = neg - jnp.max(neg, axis=0, keepdims=True)
        e = jnp.exp(neg)
        w_ref[...] = (e / jnp.sum(e, axis=0, keepdims=True)).astype(w_ref.dtype)


def rbf_weights(h_ss, w3_ss, b3_ss, basis, *, sigma, n_verts, tile_n):
    B_pad, H = h_ss.shape
    K_piv, D_pad = basis.shape
    assert D_pad % tile_n == 0
    n_j = D_pad // tile_n
    scale_over_sigma = (1000.0 / float(n_verts)) / float(sigma)
    return pl.pallas_call(
        functools.partial(_rbf_weights_kernel, scale_over_sigma=scale_over_sigma),
        out_shape=jax.ShapeDtypeStruct((K_piv, B_pad), jnp.float32),
        grid=(n_j,),
        in_specs=[
            pl.BlockSpec((B_pad, H), lambda j: (0, 0)),
            pl.BlockSpec((H, tile_n), lambda j: (0, j)),
            pl.BlockSpec((1, tile_n), lambda j: (0, j)),
            pl.BlockSpec((K_piv, tile_n), lambda j: (0, j)),
        ],
        out_specs=pl.BlockSpec((K_piv, B_pad), lambda j: (0, 0)),
        scratch_shapes=[pltpu.VMEM((K_piv, B_pad), jnp.float32)],
        compiler_params=pltpu.CompilerParams(dimension_semantics=("arbitrary",)),
    )(h_ss, w3_ss, b3_ss, basis)


# ---------------------------------------------------------------------------
# Kernel 3: D-tiled layer-3 + fused LF/HF RBF combine.
# grid = (D tiles [parallel], networks K=1+K_piv [reduction]); per tile j:
#   acc = sum_k coef[k] * (h_k @ w3_k[:, tile] + b3_k[tile]),  coef = [1, w_1..w_Kpiv]
# The [K, B, D] pivot tensor never reaches HBM; w3 tiles are each read exactly once.
# ---------------------------------------------------------------------------
def _layer3_combine_kernel(coef_ref, h_ref, w3_ref, b3_ref, out_ref, acc_ref):
    k = pl.program_id(1)

    @pl.when(k == 0)
    def _():
        acc_ref[...] = jnp.zeros_like(acc_ref)

    y = jnp.dot(h_ref[...], w3_ref[...],
                preferred_element_type=jnp.float32) + b3_ref[...]     # [B_pad, TN]
    acc_ref[...] += coef_ref[...] * y                                 # coef: [B_pad, 1]

    @pl.when(k == pl.num_programs(1) - 1)
    def _():
        out_ref[...] = acc_ref[...].astype(out_ref.dtype)


def layer3_combine(coef, h, w3, b3, *, tile_n):
    """coef: [K, B_pad, 1] f32; h: [K, B_pad, H] bf16; w3: [K, H, D_pad] bf16; b3: [K, 1, D_pad] f32."""
    K, B_pad, H = h.shape
    D_pad = w3.shape[2]
    assert D_pad % tile_n == 0
    n_j = D_pad // tile_n
    return pl.pallas_call(
        _layer3_combine_kernel,
        out_shape=jax.ShapeDtypeStruct((B_pad, D_pad), jnp.float32),
        grid=(n_j, K),
        in_specs=[
            pl.BlockSpec((None, B_pad, 1), lambda j, k: (k, 0, 0)),    # coef
            pl.BlockSpec((None, B_pad, H), lambda j, k: (k, 0, 0)),    # h (tiny, per-net)
            pl.BlockSpec((None, H, tile_n), lambda j, k: (k, 0, j)),   # w3 D-tile stream
            pl.BlockSpec((None, 1, tile_n), lambda j, k: (k, 0, j)),   # b3 D-tile
        ],
        out_specs=pl.BlockSpec((B_pad, tile_n), lambda j, k: (0, j)),
        scratch_shapes=[pltpu.VMEM((B_pad, tile_n), jnp.float32)],
        # D-tile axis parallel (v7x megacore); K is a reduction into the VMEM accumulator.
        compiler_params=pltpu.CompilerParams(
            dimension_semantics=("parallel", "arbitrary")),
    )(coef, h, w3, b3)


# ---------------------------------------------------------------------------
# Parameter init (deterministic, synthetic — no checkpoint loading)
# Network stacking order on the K_all axis: [SS2G, LF, HF_0 .. HF_{K_piv-1}]
# ---------------------------------------------------------------------------
def init_params(key, *, K_piv, hidden, n_verts, tile_n=128, f_pad=128, scale=0.05):
    D = n_verts * 3
    D_pad = _round_up(D, max(tile_n, 128))
    K_all = 2 + K_piv
    in_sizes = [10 + 4, 72 + 10 + 4] + [72] * K_piv   # SS2G, LF, HF pivots
    ks = jax.random.split(key, 7)

    # layers 1-2 (bf16 weights, fp32 biases); zero the padded input rows per net
    row_mask = (jnp.arange(f_pad)[None, :, None]
                < jnp.array(in_sizes)[:, None, None]).astype(jnp.float32)
    w1 = (scale * jax.random.normal(ks[0], (K_all, f_pad, hidden), jnp.float32)
          * row_mask).astype(jnp.bfloat16)
    b1 = scale * jax.random.normal(ks[1], (K_all, 1, hidden), jnp.float32)
    w2 = (scale * jax.random.normal(ks[2], (K_all, hidden, hidden),
                                    jnp.float32)).astype(jnp.bfloat16)
    b2 = scale * jax.random.normal(ks[3], (K_all, 1, hidden), jnp.float32)

    # layer 3 (bf16 weights, fp32 biases); zero the padded output columns (>= D)
    col_mask = (jnp.arange(D_pad) < D).astype(jnp.float32)
    w3_all = (scale * jax.random.normal(ks[4], (K_all, hidden, D_pad), jnp.float32)
              * col_mask)
    b3_all = scale * jax.random.normal(ks[5], (K_all, 1, D_pad), jnp.float32) * col_mask

    basis = _pad_axis(0.01 * jax.random.normal(ks[6], (K_piv, D), jnp.float32), 1, D_pad)

    return dict(
        w1=w1, b1=b1, w2=w2, b2=b2,
        w3_ss=w3_all[0].astype(jnp.bfloat16), b3_ss=b3_all[0],
        w3_lfhf=w3_all[1:].astype(jnp.bfloat16), b3_lfhf=b3_all[1:],
        basis=basis,
    )


def _build_padded_inputs(betas, thetas, gammas, *, cloth_type, B_pad, F_pad):
    th = mask_thetas(thetas, cloth_type)
    be = mask_betas(betas)
    ga = mask_gammas(gammas, cloth_type)

    def pad_feat(x):
        return _pad_axis(_pad_axis(x, 1, F_pad), 0, B_pad)

    ss_in = pad_feat(jnp.concatenate([be, ga], axis=1))        # 14 features
    lf_in = pad_feat(jnp.concatenate([th, be, ga], axis=1))    # 86 features
    hf_in = pad_feat(th)                                       # 72 features
    return ss_in, lf_in, hf_in


# ---------------------------------------------------------------------------
# Full TailorNet forward (LF + HF pivots + SS2G + RBF interpolation)
# ---------------------------------------------------------------------------
def tailornet_forward(params, betas, thetas, gammas, *, cloth_type, kernel_sigma,
                      n_verts, tile_n=128):
    B = thetas.shape[0]
    D = n_verts * 3
    B_pad = _round_up(B, 8)
    F_pad = params["w1"].shape[1]
    D_pad = params["basis"].shape[1]
    K_piv = params["basis"].shape[0]
    assert D_pad % tile_n == 0 and D_pad >= D

    ss_in, lf_in, hf_in = _build_padded_inputs(
        betas, thetas, gammas, cloth_type=cloth_type, B_pad=B_pad, F_pad=F_pad)
    x_all = jnp.stack([ss_in, lf_in] + [hf_in] * K_piv, axis=0)     # [K_all, B_pad, F_pad]

    # layers 1-2 for all networks, once each
    h_all = mlp12_stack(x_all, params["w1"], params["b1"],
                        params["w2"], params["b2"])                  # [K_all, B_pad, H] bf16

    # SS2G layer-3 + RBF pivot weights (D-tiled, distances via MXU)
    w = rbf_weights(h_all[0], params["w3_ss"], params["b3_ss"], params["basis"],
                    sigma=kernel_sigma, n_verts=n_verts, tile_n=tile_n)  # [K_piv, B_pad]

    # fused layer-3 + combine: coef[0]=1 for LF, coef[1:]=RBF weights for HF pivots
    coef = jnp.concatenate([jnp.ones((1, B_pad), jnp.float32), w], axis=0)[:, :, None]
    out_pad = layer3_combine(coef, h_all[1:], params["w3_lfhf"], params["b3_lfhf"],
                             tile_n=tile_n)                          # [B_pad, D_pad] f32

    return out_pad[:B, :D].reshape(B, n_verts, 3)


# ---------------------------------------------------------------------------
# TailorNetLF.forward (the original module spec): mask -> concat -> 3-layer MLP
# (reuses the same kernels with K=1 and unit coefficient)
# ---------------------------------------------------------------------------
def tailornet_lf_forward(params, betas, thetas, gammas, *, cloth_type, n_verts,
                         tile_n=128):
    B = thetas.shape[0]
    D = n_verts * 3
    B_pad = _round_up(B, 8)
    F_pad = params["w1"].shape[1]

    _, lf_in, _ = _build_padded_inputs(
        betas, thetas, gammas, cloth_type=cloth_type, B_pad=B_pad, F_pad=F_pad)
    h = mlp12_stack(lf_in[None], params["w1"][1:2], params["b1"][1:2],
                    params["w2"][1:2], params["b2"][1:2])            # [1, B_pad, H]
    coef = jnp.ones((1, B_pad, 1), jnp.float32)
    out_pad = layer3_combine(coef, h, params["w3_lfhf"][0:1], params["b3_lfhf"][0:1],
                             tile_n=tile_n)
    return out_pad[:B, :D]                                           # [B, n_verts*3]


# TODO(synk): TailornetDataset / checkpoint loading has no Pallas equivalent; the
# pivot basis and all MLP weights are synthesized deterministically instead.


if __name__ == "__main__":
    key = jax.random.PRNGKey(0)
    B = 2            # batch
    H = 128          # hidden_size (small demo; real model uses 1024)
    NV = 80          # n_verts (small synthetic mesh) -> D = 240, padded to 256
    K_piv = 4        # number of shape/style pivots (HF networks)
    TN = 128         # D-tile width (lane-dense; pick 2048-4096 at real sizes)
    cloth_type = "old-t-shirt"
    kernel_sigma = 0.01

    k_par, k_th, k_bg = jax.random.split(key, 3)
    params = init_params(k_par, K_piv=K_piv, hidden=H, n_verts=NV, tile_n=TN)

    thetas = jax.random.normal(k_th, (B, 72), jnp.float32)
    bg = jax.random.normal(k_bg, (B, 14), jnp.float32)
    betas, gammas = bg[:, :10], bg[:, 10:]

    pred_disp = tailornet_forward(
        params, betas, thetas, gammas,
        cloth_type=cloth_type, kernel_sigma=kernel_sigma, n_verts=NV, tile_n=TN)
    pred_disp = jax.block_until_ready(pred_disp)

    lf_verts = tailornet_lf_forward(
        params, betas, thetas, gammas,
        cloth_type=cloth_type, n_verts=NV, tile_n=TN)
    lf_verts = jax.block_until_ready(lf_verts)

    assert pred_disp.shape == (B, NV, 3)
    assert lf_verts.shape == (B, NV * 3)
    assert bool(jnp.all(jnp.isfinite(pred_disp)))
    assert bool(jnp.all(jnp.isfinite(lf_verts)))
    print("KERNEL_OK")
</pallas_src>

<mosaic_0001>
module attributes {stable_mosaic.version = 11 : i64} {
  func.func @_mlp12_kernel(%arg0: i32, %arg1: memref<1x8x128xf32, #tpu.memory_space<vmem>>, %arg2: memref<1x128x128xbf16, #tpu.memory_space<vmem>>, %arg3: memref<1x1x128xf32, #tpu.memory_space<vmem>>, %arg4: memref<1x128x128xbf16, #tpu.memory_space<vmem>>, %arg5: memref<1x1x128xf32, #tpu.memory_space<vmem>>, %arg6: memref<1x8x128xbf16, #tpu.memory_space<vmem>>) attributes {dimension_semantics = [#tpu.dimension_semantics<parallel>], iteration_bounds = array<i64: 6>, scalar_prefetch = 0 : i64, scratch_operands = 0 : i64, tpu.core_type = #tpu.core_type<tc>, window_params = [{transform_indices = @transform_0, window_bounds = array<i64: 1, 8, 128>}, {transform_indices = @transform_1, window_bounds = array<i64: 1, 128, 128>}, {transform_indices = @transform_2, window_bounds = array<i64: 1, 1, 128>}, {transform_indices = @transform_3, window_bounds = array<i64: 1, 128, 128>}, {transform_indices = @transform_4, window_bounds = array<i64: 1, 1, 128>}, {transform_indices = @transform_5, window_bounds = array<i64: 1, 8, 128>}]} {
    %c0 = arith.constant 0 : index
    %c0_0 = arith.constant 0 : index
    %c0_1 = arith.constant 0 : index
    %0 = vector.load %arg1[%c0, %c0_0, %c0_1] : memref<1x8x128xf32, #tpu.memory_space<vmem>>, vector<1x8x128xf32>
    %1 = vector.shape_cast %0 : vector<1x8x128xf32> to vector<8x128xf32>
    %2 = arith.truncf %1 : vector<8x128xf32> to vector<8x128xbf16>
    %c0_2 = arith.constant 0 : index
    %c0_3 = arith.constant 0 : index
    %c0_4 = arith.constant 0 : index
    %3 = vector.load %arg2[%c0_2, %c0_3, %c0_4] : memref<1x128x128xbf16, #tpu.memory_space<vmem>>, vector<1x128x128xbf16>
    %4 = vector.shape_cast %3 : vector<1x128x128xbf16> to vector<128x128xbf16>
    %cst = arith.constant dense<0.000000e+00> : vector<8x128xf32>
    %5 = tpu.matmul %2, %4, %cst {dimension_numbers = #tpu.dot_dimension_numbers<[1], [0], [0], [1], [0, 0, 1, 1], [], []>} : vector<8x128xbf16>, vector<128x128xbf16>, vector<8x128xf32> -> vector<8x128xf32>
    %c0_5 = arith.constant 0 : index
    %c0_6 = arith.constant 0 : index
    %c0_7 = arith.constant 0 : index
    %6 = vector.load %arg3[%c0_5, %c0_6, %c0_7] : memref<1x1x128xf32, #tpu.memory_space<vmem>>, vector<1x1x128xf32>
    %7 = vector.shape_cast %6 : vector<1x1x128xf32> to vector<1x128xf32>
    %8 = vector.broadcast %7 : vector<1x128xf32> to vector<8x128xf32>
    %9 = arith.addf %5, %8 : vector<8x128xf32>
    %cst_8 = arith.constant 0.000000e+00 : f32
    %10 = vector.broadcast %cst_8 : f32 to vector<8x128xf32>
    %11 = arith.maximumf %9, %10 : vector<8x128xf32>
    %12 = arith.truncf %11 : vector<8x128xf32> to vector<8x128xbf16>
    %c0_9 = arith.constant 0 : index
    %c0_10 = arith.constant 0 : index
    %c0_11 = arith.constant 0 : index
    %13 = vector.load %arg4[%c0_9, %c0_10, %c0_11] : memref<1x128x128xbf16, #tpu.memory_space<vmem>>, vector<1x128x128xbf16>
    %14 = vector.shape_cast %13 : vector<1x128x128xbf16> to vector<128x128xbf16>
    %cst_12 = arith.constant dense<0.000000e+00> : vector<8x128xf32>
    %15 = tpu.matmul %12, %14, %cst_12 {dimension_numbers = #tpu.dot_dimension_numbers<[1], [0], [0], [1], [0, 0, 1, 1], [], []>} : vector<8x128xbf16>, vector<128x128xbf16>, vector<8x128xf32> -> vector<8x128xf32>
    %c0_13 = arith.constant 0 : index
    %c0_14 = arith.constant 0 : index
    %c0_15 = arith.constant 0 : index
    %16 = vector.load %arg5[%c0_13, %c0_14, %c0_15] : memref<1x1x128xf32, #tpu.memory_space<vmem>>, vector<1x1x128xf32>
    %17 = vector.shape_cast %16 : vector<1x1x128xf32> to vector<1x128xf32>
    %18 = vector.broadcast %17 : vector<1x128xf32> to vector<8x128xf32>
    %19 = arith.addf %15, %18 : vector<8x128xf32>
    %cst_16 = arith.constant 0.000000e+00 : f32
    %20 = vector.broadcast %cst_16 : f32 to vector<8x128xf32>
    %21 = arith.maximumf %19, %20 : vector<8x128xf32>
    %22 = arith.truncf %21 : vector<8x128xf32> to vector<8x128xbf16>
    %c0_17 = arith.constant 0 : index
    %c0_18 = arith.constant 0 : index
    %c0_19 = arith.constant 0 : index
    %23 = vector.load %arg6[%c0_17, %c0_18, %c0_19] : memref<1x8x128xbf16, #tpu.memory_space<vmem>>, vector<1x8x128xbf16>
    %24 = vector.shape_cast %23 : vector<1x8x128xbf16> to vector<8x128xbf16>
    %25 = vector.shape_cast %22 : vector<8x128xbf16> to vector<1x8x128xbf16>
    tpu.vector_store %arg6[%c0_17, %c0_18, %c0_19], %25 {strides = array<i32>} : memref<1x8x128xbf16, #tpu.memory_space<vmem>>, vector<1x8x128xbf16>,
    return
  }
  func.func @transform_0(%arg0: i32) -> (i32, i32, i32) {
    %c0_i32 = arith.constant 0 : i32
    %c0_i32_0 = arith.constant 0 : i32
    %c0_i32_1 = arith.constant 0 : i32
    return %arg0, %c0_i32, %c0_i32_0 : i32, i32, i32
  }
  func.func @transform_1(%arg0: i32) -> (i32, i32, i32) {
    %c0_i32 = arith.constant 0 : i32
    %c0_i32_0 = arith.constant 0 : i32
    %c0_i32_1 = arith.constant 0 : i32
    return %arg0, %c0_i32, %c0_i32_0 : i32, i32, i32
  }
  func.func @transform_2(%arg0: i32) -> (i32, i32, i32) {
    %c0_i32 = arith.constant 0 : i32
    %c0_i32_0 = arith.constant 0 : i32
    %c0_i32_1 = arith.constant 0 : i32
    return %arg0, %c0_i32, %c0_i32_0 : i32, i32, i32
  }
  func.func @transform_3(%arg0: i32) -> (i32, i32, i32) {
    %c0_i32 = arith.constant 0 : i32
    %c0_i32_0 = arith.constant 0 : i32
    %c0_i32_1 = arith.constant 0 : i32
    return %arg0, %c0_i32, %c0_i32_0 : i32, i32, i32
  }
  func.func @transform_4(%arg0: i32) -> (i32, i32, i32) {
    %c0_i32 = arith.constant 0 : i32
    %c0_i32_0 = arith.constant 0 : i32
    %c0_i32_1 = arith.constant 0 : i32
    return %arg0, %c0_i32, %c0_i32_0 : i32, i32, i32
  }
  func.func @transform_5(%arg0: i32) -> (i32, i32, i32) {
    %c0_i32 = arith.constant 0 : i32
    %c0_i32_0 = arith.constant 0 : i32
    %c0_i32_1 = arith.constant 0 : i32
    return %arg0, %c0_i32, %c0_i32_0 : i32, i32, i32
  }
}

</mosaic_0001>

<llo_original>
// kernel: tpu_custom_call.1
$region0: #{tpu_custom_call.1}
  #allocation0 [shape = 'u32[]', space=smem, size = 0x4, offset = 0x4, fixed_abs, tag = 'smem constant byte address 0x4 - core index']
  #allocation1 [shape = 'u32[72,128]{1,0:T(1,128)}', space=vmem, size = 0x9000, scoped, tag = 'internal scratch']
  %s0 = inlined_call_operand.hbm [shape: f32[6,8,128], index: 0, kind: input, shape index: {}]
  %s1 = inlined_call_operand.hbm [shape: bf16[6,128,128], index: 1, kind: input, shape index: {}]
  %s2 = inlined_call_operand.hbm [shape: f32[6,1,128], index: 2, kind: input, shape index: {}]
  %s3 = inlined_call_operand.hbm [shape: bf16[6,128,128], index: 3, kind: input, shape index: {}]
  %s4 = inlined_call_operand.hbm [shape: f32[6,1,128], index: 4, kind: input, shape index: {}]
  %s5 = inlined_call_operand.hbm [shape: bf16[6,8,128], index: 5, kind: output, shape index: {}]
  %s6 = sld [smem:[#allocation0]]
  $region73: #{tpu_custom_call.1} parent=0
    _
  %s8 = ssub.s32 1, %s6
  %s9 = scalar_select 0, %s8, %s6
  $region1: #{tpu_custom_call.1} parent=0
    #allocation2 [shape = 'u8[8192]{0}', space=vmem, size = 0x2000, scoped, tag = 'input window, operand 0']
    #allocation3 [shape = 's32[2]{0}', space=sflag, size = 0x8, scoped, tag = 'scoped memory for tpu_custom_call.1']
    #allocation4 [shape = 's32[2]{0}', space=sflag, size = 0x8, scoped, tag = 'scoped memory for tpu_custom_call.1']
    #allocation5 [shape = 'u8[65536]{0}', space=vmem, size = 0x10000, scoped, tag = 'input window, operand 1']
    #allocation6 [shape = 's32[2]{0}', space=sflag, size = 0x8, scoped, tag = 'scoped memory for tpu_custom_call.1']
    #allocation7 [shape = 'u8[1024]{0}', space=vmem, size = 0x400, scoped, tag = 'input window, operand 2']
    #allocation8 [shape = 'u8[65536]{0}', space=vmem, size = 0x10000, scoped, tag = 'input window, operand 3']
    #allocation9 [shape = 's32[2]{0}', space=sflag, size = 0x8, scoped, tag = 'scoped memory for tpu_custom_call.1']
    #allocation10 [shape = 'u8[1024]{0}', space=vmem, size = 0x400, scoped, tag = 'input window, operand 4']
    #allocation11 [shape = 'u8[4096]{0}', space=vmem, size = 0x1000, scoped, tag = 'output window, operand 0']
    %10 = vsyncpa [#allocation3], 0
    %s11 = scalar_lea.sflag [#allocation3], 1
    %12 = vsyncpa %s11, 0
    %13 = vsyncpa [#allocation6], 0
    %s14 = scalar_lea.sflag [#allocation6], 1
    %15 = vsyncpa %s14, 0
    %16 = vsyncpa [#allocation9], 0
    %s17 = scalar_lea.sflag [#allocation9], 1
    %18 = vsyncpa %s17, 0
    %19 = vsyncpa [#allocation4], 0
    %s20 = scalar_lea.sflag [#allocation4], 1
    %21 = vsyncpa %s20, 0
    loop: start=0, step=1, limit=8
    $region2: #{tpu_custom_call.1} parent=1 // loop_pre_header
      _
    $region3: #{tpu_custom_call.1} parent=1 // loop_header
      %s23 = sphi 0, %s27
      %p24 = scmp.ge.s32.totalorder %s23, 8
      %s33 = sphi 0, %s35
      %s36 = sphi 0, %s33
      %s37 = sphi 0, %s36
      %s53 = sphi 0, %s37
      %s59 = sphi 0, %s61
      %s62 = sphi 0, %s59
      %s63 = sphi 0, %s62
      %s79 = sphi 0, %s63
      %s85 = sphi 0, %s87
      %s88 = sphi 0, %s85
      %s89 = sphi 0, %s88
      %s105 = sphi 0, %s89
      %s111 = sphi 0, %s113
      %s114 = sphi 0, %s111
      %s115 = sphi 0, %s114
      %s131 = sphi 0, %s115
      %s137 = sphi 0, %s139
      %s140 = sphi 0, %s137
      %s141 = sphi 0, %s140
      %s157 = sphi 0, %s141
      %s163 = sphi 0, %s165
      %s166 = sphi 0, %s163
      %s167 = sphi 0, %s166
      %s183 = sphi 0, %s167
    $region4: #{tpu_custom_call.1} parent=1 // loop_header_branch
      %26 = sbr.rel (%p24) target = $region8
    $region5: #{tpu_custom_call.1} parent=1 // loop_body
      %s28 = ssub.s32 %s23, 1
      %s29 = ssub.s32 %s23, 2
      %s30 = sadd.s32 %s23, 1
      %s31 = ssub.s32 %s23, %s30
      %p32 = scmp.eq.s32.totalorder %s31, 0
      %s34 = sadd.s32 %s33, 1
      %s35 = scalar_select %p32, %s33, %s34
      %p38 = pneg %p32
      %p39 = scmp.eq.s32.totalorder %s23, 5
      %p40 = por %p38, %p39
      %p41 = scmp.ne.s32.totalorder %s33, %s36
      %p42 = scmp.eq.s32.totalorder %s23, 0
      %p43 = por %p41, %p42
      %p44 = scmp.ne.s32.totalorder %s33, %s36
      %p45 = scmp.eq.s32.totalorder %s28, 5
      %p46 = por %p44, %p45
      %p47 = scmp.ne.s32.totalorder %s36, %s37
      %p48 = scmp.eq.s32.totalorder %s28, 0
      %p49 = por %p47, %p48
      %p50 = scmp.ne.s32.totalorder %s36, %s37
      %p51 = scmp.eq.s32.totalorder %s29, 5
      %p52 = por %p50, %p51
      %p54 = scmp.ne.s32.totalorder %s37, %s53
      %p55 = scmp.eq.s32.totalorder %s29, 0
      %p56 = por %p54, %p55
      %s57 = ssub.s32 %s23, %s30
      %p58 = scmp.eq.s32.totalorder %s57, 0
      %s60 = sadd.s32 %s59, 1
      %s61 = scalar_select %p58, %s59, %s60
      %p64 = pneg %p58
      %p65 = scmp.eq.s32.totalorder %s23, 5
      %p66 = por %p64, %p65
      %p67 = scmp.ne.s32.totalorder %s59, %s62
      %p68 = scmp.eq.s32.totalorder %s23, 0
      %p69 = por %p67, %p68
      %p70 = scmp.ne.s32.totalorder %s59, %s62
      %p71 = scmp.eq.s32.totalorder %s28, 5
      %p72 = por %p70, %p71
      %p73 = scmp.ne.s32.totalorder %s62, %s63
      %p74 = scmp.eq.s32.totalorder %s28, 0
      %p75 = por %p73, %p74
      %p76 = scmp.ne.s32.totalorder %s62, %s63
      %p77 = scmp.eq.s32.totalorder %s29, 5
      %p78 = por %p76, %p77
      %p80 = scmp.ne.s32.totalorder %s63, %s79
      %p81 = scmp.eq.s32.totalorder %s29, 0
      %p82 = por %p80, %p81
      %s83 = ssub.s32 %s23, %s30
      %p84 = scmp.eq.s32.totalorder %s83, 0
      %s86 = sadd.s32 %s85, 1
      %s87 = scalar_select %p84, %s85, %s86
      %p90 = pneg %p84
      %p91 = scmp.eq.s32.totalorder %s23, 5
      %p92 = por %p90, %p91
      %p93 = scmp.ne.s32.totalorder %s85, %s88
      %p94 = scmp.eq.s32.totalorder %s23, 0
      %p95 = por %p93, %p94
      %p96 = scmp.ne.s32.totalorder %s85, %s88
      %p97 = scmp.eq.s32.totalorder %s28, 5
      %p98 = por %p96, %p97
      %p99 = scmp.ne.s32.totalorder %s88, %s89
      %p100 = scmp.eq.s32.totalorder %s28, 0
      %p101 = por %p99, %p100
      %p102 = scmp.ne.s32.totalorder %s88, %s89
      %p103 = scmp.eq.s32.totalorder %s29, 5
      %p104 = por %p102, %p103
      %p106 = scmp.ne.s32.totalorder %s89, %s105
      %p107 = scmp.eq.s32.totalorder %s29, 0
      %p108 = por %p106, %p107
      %s109 = ssub.s32 %s23, %s30
      %p110 = scmp.eq.s32.totalorder %s109, 0
      %s112 = sadd.s32 %s111, 1
      %s113 = scalar_select %p110, %s111, %s112
      %p116 = pneg %p110
      %p117 = scmp.eq.s32.totalorder %s23, 5
      %p118 = por %p116, %p117
      %p119 = scmp.ne.s32.totalorder %s111, %s114
      %p120 = scmp.eq.s32.totalorder %s23, 0
      %p121 = por %p119, %p120
      %p122 = scmp.ne.s32.totalorder %s111, %s114
      %p123 = scmp.eq.s32.totalorder %s28, 5
      %p124 = por %p122, %p123
      %p125 = scmp.ne.s32.totalorder %s114, %s115
      %p126 = scmp.eq.s32.totalorder %s28, 0
      %p127 = por %p125, %p126
      %p128 = scmp.ne.s32.totalorder %s114, %s115
      %p129 = scmp.eq.s32.totalorder %s29, 5
      %p130 = por %p128, %p129
      %p132 = scmp.ne.s32.totalorder %s115, %s131
      %p133 = scmp.eq.s32.totalorder %s29, 0
      %p134 = por %p132, %p133
      %s135 = ssub.s32 %s23, %s30
      %p136 = scmp.eq.s32.totalorder %s135, 0
      %s138 = sadd.s32 %s137, 1
      %s139 = scalar_select %p136, %s137, %s138
      %p142 = pneg %p136
      %p143 = scmp.eq.s32.totalorder %s23, 5
      %p144 = por %p142, %p143
      %p145 = scmp.ne.s32.totalorder %s137, %s140
      %p146 = scmp.eq.s32.totalorder %s23, 0
      %p147 = por %p145, %p146
      %p148 = scmp.ne.s32.totalorder %s137, %s140
      %p149 = scmp.eq.s32.totalorder %s28, 5
      %p150 = por %p148, %p149
      %p151 = scmp.ne.s32.totalorder %s140, %s141
      %p152 = scmp.eq.s32.totalorder %s28, 0
      %p153 = por %p151, %p152
      %p154 = scmp.ne.s32.totalorder %s140, %s141
      %p155 = scmp.eq.s32.totalorder %s29, 5
      %p156 = por %p154, %p155
      %p158 = scmp.ne.s32.totalorder %s141, %s157
      %p159 = scmp.eq.s32.totalorder %s29, 0
      %p160 = por %p158, %p159
      %s161 = ssub.s32 %s23, %s30
      %p162 = scmp.eq.s32.totalorder %s161, 0
      %s164 = sadd.s32 %s163, 1
      %s165 = scalar_select %p162, %s163, %s164
      %p168 = pneg %p162
      %p169 = scmp.eq.s32.totalorder %s23, 5
      %p170 = por %p168, %p169
      %p171 = scmp.ne.s32.totalorder %s163, %s166
      %p172 = scmp.eq.s32.totalorder %s23, 0
      %p173 = por %p171, %p172
      %p174 = scmp.ne.s32.totalorder %s163, %s166
      %p175 = scmp.eq.s32.totalorder %s28, 5
      %p176 = por %p174, %p175
      %p177 = scmp.ne.s32.totalorder %s166, %s167
      %p178 = scmp.eq.s32.totalorder %s28, 0
      %p179 = por %p177, %p178
      %p180 = scmp.ne.s32.totalorder %s166, %s167
      %p181 = scmp.eq.s32.totalorder %s29, 5
      %p182 = por %p180, %p181
      %p184 = scmp.ne.s32.totalorder %s167, %s183
      %p185 = scmp.eq.s32.totalorder %s29, 0
      %p186 = por %p184, %p185
      %p187 = scmp.le.s32.totalorder 1, %s23
      %p188 = scmp.lt.s32.totalorder %s23, 7
      %p189 = pnand %p187, %p188
      %p190 = pneg %p189
      // Predicated region
      $region9: #{tpu_custom_call.1} parent=5 // pred_check
        _
      $region10: #{tpu_custom_call.1} parent=5 // pred_check_branch
        %192 = sbr.rel (%p189) target = $region12
      $region11: #{tpu_custom_call.1} parent=5 // pred_region
        %s193 = ssub.s32 %s23, 1
      $region12: #{tpu_custom_call.1} parent=5 // pred_fallthru
        _
      %p194 = scmp.lt.s32.totalorder %s23, 6
      // Predicated region
      $region13: #{tpu_custom_call.1} parent=5 // pred_check
        %p195 = pneg %p194
      $region14: #{tpu_custom_call.1} parent=5 // pred_check_branch
        %197 = sbr.rel (%p195) target = $region16
      $region15: #{tpu_custom_call.1} parent=5 // pred_region
        // Predicated region
        $region17: #{tpu_custom_call.1} parent=15 // pred_check
          %p198 = pneg %p43
        $region18: #{tpu_custom_call.1} parent=15 // pred_check_branch
          %200 = sbr.rel (%p198) target = $region20
        $region19: #{tpu_custom_call.1} parent=15 // pred_region
          %s201 = sand.u32 %s33, 1
          %s202 = scalar_lea.sflag [#allocation3], %s201
          %s203 = sand.u32 %s33, 1
          %s204 = smul.addr %s203, 8
          %s205 = scalar_lea.vmem [#allocation2], %s204
          %207 = vsyncadd %s202, 0
          %s208 = smul.addr %s23, 8
          %s209 = scalar_lea.hbm %s0, %s208
          %s211 = sshll.u32 %s209, 4
          %s212 = int_to_ptr.hbm [resolvable:$true] %s211
          %s213 = sshll.u32 %s205, 4
          %s214 = int_to_ptr.vmem [resolvable:$true] %s213
          %216 = dma.hbm_to_vmem [thread:$0]  %s212, 128, %s214, %s202
        $region20: #{tpu_custom_call.1} parent=15 // pred_fallthru
          _
        // Predicated region
        $region21: #{tpu_custom_call.1} parent=15 // pred_check
          %p217 = pneg %p69
        $region22: #{tpu_custom_call.1} parent=15 // pred_check_branch
          %219 = sbr.rel (%p217) target = $region24
        $region23: #{tpu_custom_call.1} parent=15 // pred_region
          %s220 = sand.u32 %s23, 1
          %s221 = scalar_lea.sflag [#allocation6], %s220
          %s222 = sand.u32 %s59, 1
          %s223 = smul.addr %s222, 64
          %s224 = scalar_lea.vmem [#allocation5], %s223
          %226 = vsyncadd %s221, 0
          %s227 = smul.addr %s23, 16
          %s228 = smul.addr %s227, 4
          %s229 = scalar_lea.hbm %s1, %s228
          %s230 = sshll.u32 %s229, 4
          %s231 = int_to_ptr.hbm [resolvable:$true] %s230
          %s232 = sshll.u32 %s224, 4
          %s233 = int_to_ptr.vmem [resolvable:$true] %s232
          %238 = dma.hbm_to_vmem [thread:$0]  %s231, 1024, %s233, %s221, 64, 64, 4
        $region24: #{tpu_custom_call.1} parent=15 // pred_fallthru
          _
        // Predicated region
        $region25: #{tpu_custom_call.1} parent=15 // pred_check
          %p239 = pneg %p95
        $region26: #{tpu_custom_call.1} parent=15 // pred_check_branch
          %241 = sbr.rel (%p239) target = $region28
        $region27: #{tpu_custom_call.1} parent=15 // pred_region
          %s242 = sand.u32 %s23, 1
          %s243 = scalar_lea.sflag [#allocation6], %s242
          %s244 = sand.u32 %s85, 1
          %s245 = scalar_lea.vmem [#allocation7], %s244
          %247 = vsyncadd %s243, 0
          %s248 = scalar_lea.hbm %s2, %s23
          %s250 = sshll.u32 %s248, 4
          %s251 = int_to_ptr.hbm [resolvable:$true] %s250
          %s252 = sshll.u32 %s245, 4
          %s253 = int_to_ptr.vmem [resolvable:$true] %s252
          %255 = dma.hbm_to_vmem [thread:$0]  %s251, 16, %s253, %s243
        $region28: #{tpu_custom_call.1} parent=15 // pred_fallthru
          _
        // Predicated region
        $region29: #{tpu_custom_call.1} parent=15 // pred_check
          %p256 = pneg %p121
        $region30: #{tpu_custom_call.1} parent=15 // pred_check_branch
          %258 = sbr.rel (%p256) target = $region32
        $region31: #{tpu_custom_call.1} parent=15 // pred_region
          %s259 = sand.u32 %s23, 1
          %s260 = scalar_lea.sflag [#allocation9], %s259
          %s261 = sand.u32 %s111, 1
          %s262 = smul.addr %s261, 64
          %s263 = scalar_lea.vmem [#allocation8], %s262
          %265 = vsyncadd %s260, 0
          %s266 = smul.addr %s23, 16
          %s267 = smul.addr %s266, 4
          %s268 = scalar_lea.hbm %s3, %s267
          %s269 = sshll.u32 %s268, 4
          %s270 = int_to_ptr.hbm [resolvable:$true] %s269
          %s271 = sshll.u32 %s263, 4
          %s272 = int_to_ptr.vmem [resolvable:$true] %s271
          %277 = dma.hbm_to_vmem [thread:$0]  %s270, 1024, %s272, %s260, 64, 64, 4
        $region32: #{tpu_custom_call.1} parent=15 // pred_fallthru
          _
        // Predicated region
        $region33: #{tpu_custom_call.1} parent=15 // pred_check
          %p278 = pneg %p147
        $region34: #{tpu_custom_call.1} parent=15 // pred_check_branch
          %280 = sbr.rel (%p278) target = $region36
        $region35: #{tpu_custom_call.1} parent=15 // pred_region
          %s281 = sand.u32 %s23, 1
          %s282 = scalar_lea.sflag [#allocation9], %s281
          %s283 = sand.u32 %s137, 1
          %s284 = scalar_lea.vmem [#allocation10], %s283
          %286 = vsyncadd %s282, 0
          %s287 = scalar_lea.hbm %s4, %s23
          %s289 = sshll.u32 %s287, 4
          %s290 = int_to_ptr.hbm [resolvable:$true] %s289
          %s291 = sshll.u32 %s284, 4
          %s292 = int_to_ptr.vmem [resolvable:$true] %s291
          %294 = dma.hbm_to_vmem [thread:$0]  %s290, 16, %s292, %s282
        $region36: #{tpu_custom_call.1} parent=15 // pred_fallthru
          _
      $region16: #{tpu_custom_call.1} parent=5 // pred_fallthru
        _
      %p295 = scmp.le.s32.totalorder 1, %s23
      %p296 = scmp.lt.s32.totalorder %s23, 7
      %p297 = pnand %p295, %p296
      %p298 = pneg %p297
      // Predicated region
      $region37: #{tpu_custom_call.1} parent=5 // pred_check
        _
      $region38: #{tpu_custom_call.1} parent=5 // pred_check_branch
        %300 = sbr.rel (%p297) target = $region40
      $region39: #{tpu_custom_call.1} parent=5 // pred_region
        %s301 = ssub.s32 %s23, 1
        %s302 = sand.u32 %s36, 1
        %s303 = scalar_lea.sflag [#allocation3], %s302
        %s304 = sand.u32 %s36, 1
        %s305 = smul.addr %s304, 8
        %s306 = scalar_lea.vmem [#allocation2], %s305
        // Predicated region
        $region41: #{tpu_custom_call.1} parent=39 // pred_check
          %p307 = pneg %p49
        $region42: #{tpu_custom_call.1} parent=39 // pred_check_branch
          %309 = sbr.rel (%p307) target = $region44
        $region43: #{tpu_custom_call.1} parent=39 // pred_region
          %311 = dma.done %s303, 128
        $region44: #{tpu_custom_call.1} parent=39 // pred_fallthru
          _
        %s312 = sand.u32 %s28, 1
        %s313 = scalar_lea.sflag [#allocation6], %s312
        %s314 = sand.u32 %s62, 1
        %s315 = smul.addr %s314, 64
        %s316 = scalar_lea.vmem [#allocation5], %s315
        // Predicated region
        $region45: #{tpu_custom_call.1} parent=39 // pred_check
          %p317 = pneg %p75
        $region46: #{tpu_custom_call.1} parent=39 // pred_check_branch
          %319 = sbr.rel (%p317) target = $region48
        $region47: #{tpu_custom_call.1} parent=39 // pred_region
          %321 = dma.done %s313, 1024
        $region48: #{tpu_custom_call.1} parent=39 // pred_fallthru
          _
        %s322 = sand.u32 %s28, 1
        %s323 = scalar_lea.sflag [#allocation6], %s322
        %s324 = sand.u32 %s88, 1
        %s325 = scalar_lea.vmem [#allocation7], %s324
        // Predicated region
        $region49: #{tpu_custom_call.1} parent=39 // pred_check
          %p326 = pneg %p101
        $region50: #{tpu_custom_call.1} parent=39 // pred_check_branch
          %328 = sbr.rel (%p326) target = $region52
        $region51: #{tpu_custom_call.1} parent=39 // pred_region
          %330 = dma.done %s323, 16
        $region52: #{tpu_custom_call.1} parent=39 // pred_fallthru
          _
        %s331 = sand.u32 %s28, 1
        %s332 = scalar_lea.sflag [#allocation9], %s331
        %s333 = sand.u32 %s114, 1
        %s334 = smul.addr %s333, 64
        %s335 = scalar_lea.vmem [#allocation8], %s334
        // Predicated region
        $region53: #{tpu_custom_call.1} parent=39 // pred_check
          %p336 = pneg %p127
        $region54: #{tpu_custom_call.1} parent=39 // pred_check_branch
          %338 = sbr.rel (%p336) target = $region56
        $region55: #{tpu_custom_call.1} parent=39 // pred_region
          %340 = dma.done %s332, 1024
        $region56: #{tpu_custom_call.1} parent=39 // pred_fallthru
          _
        %s341 = sand.u32 %s28, 1
        %s342 = scalar_lea.sflag [#allocation9], %s341
        %s343 = sand.u32 %s140, 1
        %s344 = scalar_lea.vmem [#allocation10], %s343
        // Predicated region
        $region57: #{tpu_custom_call.1} parent=39 // pred_check
          %p345 = pneg %p153
        $region58: #{tpu_custom_call.1} parent=39 // pred_check_branch
          %347 = sbr.rel (%p345) target = $region60
        $region59: #{tpu_custom_call.1} parent=39 // pred_region
          %349 = dma.done %s342, 16
        $region60: #{tpu_custom_call.1} parent=39 // pred_fallthru
          _
        %s350 = sand.u32 %s36, 1
        %s351 = scalar_lea.sflag [#allocation3], %s350
        %s352 = sand.u32 %s36, 1
        %s353 = smul.addr %s352, 8
        %s354 = scalar_lea.vmem [#allocation2], %s353
        %p355 = pneg %p49
        %p356 = pneg %p46
        %s357 = sand.u32 %s28, 1
        %s358 = scalar_lea.sflag [#allocation6], %s357
        %s359 = sand.u32 %s62, 1
        %s360 = smul.addr %s359, 64
        %s361 = scalar_lea.vmem [#allocation5], %s360
        %p362 = pneg %p75
        %p363 = pneg %p72
        %s364 = sand.u32 %s28, 1
        %s365 = scalar_lea.sflag [#allocation6], %s364
        %s366 = sand.u32 %s88, 1
        %s367 = scalar_lea.vmem [#allocation7], %s366
        %p368 = pneg %p101
        %p369 = pneg %p98
        %s370 = sand.u32 %s28, 1
        %s371 = scalar_lea.sflag [#allocation9], %s370
        %s372 = sand.u32 %s114, 1
        %s373 = smul.addr %s372, 64
        %s374 = scalar_lea.vmem [#allocation8], %s373
        %p375 = pneg %p127
        %p376 = pneg %p124
        %s377 = sand.u32 %s28, 1
        %s378 = scalar_lea.sflag [#allocation9], %s377
        %s379 = sand.u32 %s140, 1
        %s380 = scalar_lea.vmem [#allocation10], %s379
        %p381 = pneg %p153
        %p382 = pneg %p150
        %p383 = pneg %p179
        %p384 = pneg %p176
        %s385 = sand.u32 %s166, 1
        %s386 = scalar_lea.sflag [#allocation4], %s385
        %s387 = sand.u32 %s166, 1
        %s388 = smul.addr %s387, 4
        %s389 = scalar_lea.vmem [#allocation11], %s388
        %v390 = vld [vmem:[%s306] sm:$0xff]
        %v391 = vpack.c.bf16 %v390, %v390
        %v392 = vld [vmem:[%s316] sm:$0xf]
        %v393 = vld [vmem:[%s316 + $0x4] sm:$0xf]
        %v394 = vld [vmem:[%s316 + $0x8] sm:$0xf]
        %v395 = vld [vmem:[%s316 + $0xc] sm:$0xf]
        %v396 = vld [vmem:[%s316 + $0x10] sm:$0xf]
        %v397 = vld [vmem:[%s316 + $0x14] sm:$0xf]
        %v398 = vld [vmem:[%s316 + $0x18] sm:$0xf]
        %v399 = vld [vmem:[%s316 + $0x1c] sm:$0xf]
        %v400 = vld [vmem:[%s316 + $0x20] sm:$0xf]
        %v401 = vld [vmem:[%s316 + $0x24] sm:$0xf]
        %v402 = vld [vmem:[%s316 + $0x28] sm:$0xf]
        %v403 = vld [vmem:[%s316 + $0x2c] sm:$0xf]
        %v404 = vld [vmem:[%s316 + $0x30] sm:$0xf]
        %v405 = vld [vmem:[%s316 + $0x34] sm:$0xf]
        %v406 = vld [vmem:[%s316 + $0x38] sm:$0xf]
        %v407 = vld [vmem:[%s316 + $0x3c] sm:$0xf]
        %v408 = vld [vmem:[%s325] sm:$0x1]
        %v410 = vperm.slane %v408, 0
        %v428 = vunpack.c.l.b16 %v392
        %v429 = vunpack.c.l.b16 %v393
        %v430 = vunpack.c.l.b16 %v394
        %v431 = vunpack.c.l.b16 %v395
        %v432 = vunpack.c.l.b16 %v396
        %v433 = vunpack.c.l.b16 %v397
        %v434 = vunpack.c.l.b16 %v398
        %v435 = vunpack.c.l.b16 %v399
        %v436 = vunpack.c.l.b16 %v400
        %v437 = vunpack.c.l.b16 %v401
        %v438 = vunpack.c.l.b16 %v402
        %v439 = vunpack.c.l.b16 %v403
        %v440 = vunpack.c.l.b16 %v404
        %v441 = vunpack.c.l.b16 %v405
        %v442 = vunpack.c.l.b16 %v406
        %v443 = vunpack.c.l.b16 %v407
        %v444 = vpack.c.b16 %v429, %v428
        %v445 = vpack.c.b16 %v431, %v430
        %v446 = vpack.c.b16 %v433, %v432
        %v447 = vpack.c.b16 %v435, %v434
        %v448 = vpack.c.b16 %v437, %v436
        %v449 = vpack.c.b16 %v439, %v438
        %v450 = vpack.c.b16 %v441, %v440
        %v451 = vpack.c.b16 %v443, %v442
        %460 = vmatpush.bf16.msra.mxu0 %v451
        %461 = vmatpush.bf16.msra.mxu0 %v450
        %462 = vmatpush.bf16.msra.mxu0 %v449
        %463 = vmatpush.bf16.msra.mxu0 %v448
        %464 = vmatpush.bf16.msra.mxu0 %v447
        %465 = vmatpush.bf16.msra.mxu0 %v446
        %466 = vmatpush.bf16.msra.mxu0 %v445
        %467 = vmatpush.bf16.msra.mxu0 %v444
        %468 = vmatmul.bf16.gmra.mxu0 %v391
        %v469 = vpop.f32.mrf.mxu0
        %v470 = vadd.f32 %v410, %v469
        %v471 = vpop.f32.mrf.mxu0
        %472 = vdwg.mxu0
        %v473 = vmax.f32 %v470, 0.0
        %v474 = vpack.c.bf16 %v473, %v473
        %v475 = vld [vmem:[%s335] sm:$0xf]
        %v476 = vld [vmem:[%s335 + $0x4] sm:$0xf]
        %v477 = vld [vmem:[%s335 + $0x8] sm:$0xf]
        %v478 = vld [vmem:[%s335 + $0xc] sm:$0xf]
        %v479 = vld [vmem:[%s335 + $0x10] sm:$0xf]
        %v480 = vld [vmem:[%s335 + $0x14] sm:$0xf]
        %v481 = vld [vmem:[%s335 + $0x18] sm:$0xf]
        %v482 = vld [vmem:[%s335 + $0x1c] sm:$0xf]
        %v483 = vld [vmem:[%s335 + $0x20] sm:$0xf]
        %v484 = vld [vmem:[%s335 + $0x24] sm:$0xf]
        %v485 = vld [vmem:[%s335 + $0x28] sm:$0xf]
        %v486 = vld [vmem:[%s335 + $0x2c] sm:$0xf]
        %v487 = vld [vmem:[%s335 + $0x30] sm:$0xf]
        %v488 = vld [vmem:[%s335 + $0x34] sm:$0xf]
        %v489 = vld [vmem:[%s335 + $0x38] sm:$0xf]
        %v490 = vld [vmem:[%s335 + $0x3c] sm:$0xf]
        %v491 = vld [vmem:[%s344] sm:$0x1]
        %v493 = vperm.slane %v491, 0
        %v511 = vunpack.c.l.b16 %v475
        %v512 = vunpack.c.l.b16 %v476
        %v513 = vunpack.c.l.b16 %v477
        %v514 = vunpack.c.l.b16 %v478
        %v515 = vunpack.c.l.b16 %v479
        %v516 = vunpack.c.l.b16 %v480
        %v517 = vunpack.c.l.b16 %v481
        %v518 = vunpack.c.l.b16 %v482
        %v519 = vunpack.c.l.b16 %v483
        %v520 = vunpack.c.l.b16 %v484
        %v521 = vunpack.c.l.b16 %v485
        %v522 = vunpack.c.l.b16 %v486
        %v523 = vunpack.c.l.b16 %v487
        %v524 = vunpack.c.l.b16 %v488
        %v525 = vunpack.c.l.b16 %v489
        %v526 = vunpack.c.l.b16 %v490
        %v527 = vpack.c.b16 %v512, %v511
        %v528 = vpack.c.b16 %v514, %v513
        %v529 = vpack.c.b16 %v516, %v515
        %v530 = vpack.c.b16 %v518, %v517
        %v531 = vpack.c.b16 %v520, %v519
        %v532 = vpack.c.b16 %v522, %v521
        %v533 = vpack.c.b16 %v524, %v523
        %v534 = vpack.c.b16 %v526, %v525
        %543 = vmatpush.bf16.msra.mxu0 %v534
        %544 = vmatpush.bf16.msra.mxu0 %v533
        %545 = vmatpush.bf16.msra.mxu0 %v532
        %546 = vmatpush.bf16.msra.mxu0 %v531
        %547 = vmatpush.bf16.msra.mxu0 %v530
        %548 = vmatpush.bf16.msra.mxu0 %v529
        %549 = vmatpush.bf16.msra.mxu0 %v528
        %550 = vmatpush.bf16.msra.mxu0 %v527
        %551 = vmatmul.bf16.gmra.mxu0 %v474
        %v552 = vpop.f32.mrf.mxu0
        %v553 = vadd.f32 %v493, %v552
        %v554 = vpop.f32.mrf.mxu0
        %555 = vdwg.mxu0
        %v556 = vmax.f32 %v553, 0.0
        %v557 = vpack.c.bf16 %v556, %v556
        %558 = vst [vmem:[%s389] sm:$0xf] %v557
        %s559 = sand.u32 %s166, 1
        %s560 = scalar_lea.sflag [#allocation4], %s559
        %s561 = sand.u32 %s166, 1
        %s562 = smul.addr %s561, 4
        %s563 = scalar_lea.vmem [#allocation11], %s562
        // Predicated region
        $region61: #{tpu_custom_call.1} parent=39 // pred_check
          %p564 = pneg %p176
        $region62: #{tpu_custom_call.1} parent=39 // pred_check_branch
          %566 = sbr.rel (%p564) target = $region64
        $region63: #{tpu_custom_call.1} parent=39 // pred_region
          %568 = vsyncadd %s560, 0
          %s569 = smul.addr %s28, 4
          %s570 = scalar_lea.hbm %s5, %s569
          %s572 = sshll.u32 %s563, 4
          %s573 = int_to_ptr.vmem [resolvable:$true] %s572
          %s574 = sshll.u32 %s570, 4
          %s575 = int_to_ptr.hbm [resolvable:$true] %s574
          %577 = dma.vmem_to_hbm [thread:$0]  %s573, 64, %s575, %s560
        $region64: #{tpu_custom_call.1} parent=39 // pred_fallthru
          _
      $region40: #{tpu_custom_call.1} parent=5 // pred_fallthru
        _
      %p578 = scmp.le.s32.totalorder 2, %s23
      // Predicated region
      $region65: #{tpu_custom_call.1} parent=5 // pred_check
        %p579 = pneg %p578
      $region66: #{tpu_custom_call.1} parent=5 // pred_check_branch
        %581 = sbr.rel (%p579) target = $region68
      $region67: #{tpu_custom_call.1} parent=5 // pred_region
        %s582 = ssub.s32 %s23, 2
        // Predicated region
        $region69: #{tpu_custom_call.1} parent=67 // pred_check
          %p583 = pneg %p182
        $region70: #{tpu_custom_call.1} parent=67 // pred_check_branch
          %585 = sbr.rel (%p583) target = $region72
        $region71: #{tpu_custom_call.1} parent=67 // pred_region
          %s586 = sand.u32 %s167, 1
          %s587 = scalar_lea.sflag [#allocation4], %s586
          %s588 = sand.u32 %s167, 1
          %s589 = smul.addr %s588, 4
          %s590 = scalar_lea.vmem [#allocation11], %s589
          %592 = dma.done %s587, 64
        $region72: #{tpu_custom_call.1} parent=67 // pred_fallthru
          _
      $region68: #{tpu_custom_call.1} parent=5 // pred_fallthru
        _
    $region6: #{tpu_custom_call.1} parent=1 // loop_footer
      %s27 = sadd.s32 1, %s23
    $region7: #{tpu_custom_call.1} parent=1 // loop_footer_branch
      %22 = sbr.rel target = $region3
    $region8: #{tpu_custom_call.1} parent=1 // loop_exit
      _
    %593 = vsyncpa [#allocation3], 1
    %s594 = scalar_lea.sflag [#allocation3], 1
    %595 = vsyncpa %s594, 1
    %596 = vsyncpa [#allocation6], 1
    %s597 = scalar_lea.sflag [#allocation6], 1
    %598 = vsyncpa %s597, 1
    %599 = vsyncpa [#allocation9], 1
    %s600 = scalar_lea.sflag [#allocation9], 1
    %601 = vsyncpa %s600, 1
    %602 = vsyncpa [#allocation4], 1
    %s603 = scalar_lea.sflag [#allocation4], 1
    %604 = vsyncpa %s603, 1

</llo_original>
